<compile_context>
chip_gen: v7x
topology: tpu7x:2x2x1
jax: 0.10.0
libtpu: 0.0.40
codegen_flags: <defaults>
</compile_context>

<pallas_src>
import functools

import jax
import jax.numpy as jnp
from jax.experimental import pallas as pl
from jax.experimental.pallas import tpu as pltpu

_PAIRWISE_EPS = 1e-6  # matches torch F.pairwise_distance default eps
_MAX_TILE_ROWS = 16384  # raised from 2048 per perf review


def _tpu_generation():
    """Best-effort TPU generation (7, 6, 5, ...) from the device kind string."""
    try:
        dev = jax.devices()[0]
        if dev.platform != "tpu":
            return 0
        kind = dev.device_kind.lower()
    except Exception:  # pragma: no cover - defensive
        return 0
    for g in (7, 6, 5, 4):
        if ("v%d" % g) in kind or ("tpu%d" % g) in kind or ("tpu %d" % g) in kind:
            return g
    return 0


def _tile_policy(generation):
    """(target bytes per input block, vmem limit ceiling) per TPU generation."""
    if generation >= 7:
        # 64 MiB VMEM / TC, 3.2 TB/s HBM: big blocks, modest ceiling.
        return 10 << 20, 56 << 20
    if generation == 6:
        # 128 MiB VMEM / TC, 1.4 TB/s HBM.
        return 6 << 20, 100 << 20
    # v5e / unknown: 128 MiB VMEM, 0.82 TB/s HBM; 2-3 MiB is already enough.
    return int(2.5 * (1 << 20)), 100 << 20


def _contrastive_kernel(o1_ref, o2_ref, lab_ref, out_ref, *, margin, batch,
                        block_rows, needs_mask):
    # Cast the streamed tile (possibly bf16/int8 on the wire) to f32 in VMEM.
    o1 = o1_ref[...].astype(jnp.float32)          # (TB, D)
    o2 = o2_ref[...].astype(jnp.float32)          # (TB, D)
    lab = lab_ref[...].astype(jnp.float32)        # (TB, 1)

    # F.pairwise_distance: ||x1 - x2 + eps||_2 along the feature axis.
    diff = o1 - o2 + _PAIRWISE_EPS
    sq_dist = jnp.sum(diff * diff, axis=-1, keepdims=True)   # (TB, 1)
    dist = jnp.sqrt(sq_dist)                                 # (TB, 1)
    hinge = jnp.maximum(margin - dist, 0.0)
    per_example = (1.0 - lab) * sq_dist + lab * (hinge * hinge)  # (TB, 1)

    if needs_mask:
        # Only emitted when B % block_rows != 0: mask padded/garbage rows of
        # the (single) partial last tile so they never contribute to the sum.
        i = pl.program_id(0)
        row = (jax.lax.broadcasted_iota(jnp.int32, per_example.shape, 0)
               + i * block_rows)
        per_example = jnp.where(row < batch, per_example, 0.0)

    tile_sum = jnp.sum(per_example)
    # Broadcast the partial sum over the (1, 1, 128) output block; the wrapper
    # reads element [i, 0, 0] of each block (all lanes carry the same value).
    out_ref[...] = jnp.full(out_ref.shape, tile_sum, dtype=jnp.float32)


def contrastive_loss(output1, output2, label, margin=1.0, block_rows=None):
    """Pallas implementation of ContrastiveLoss.forward. Returns scalar f32."""
    B, D = output1.shape
    label2d = jnp.asarray(label, jnp.float32).reshape(B, 1)

    itemsize = jnp.dtype(output1.dtype).itemsize
    # Sublane-pack-aligned row rounding: f32 -> 8, bf16 -> 16, int8/fp8 -> 32.
    sub = max(8, 32 // max(1, itemsize))

    gen = _tpu_generation()
    target_bytes, vmem_cap = _tile_policy(gen)

    if block_rows is None:
        tb = target_bytes // max(1, D * itemsize)
        tb = max(sub, min(_MAX_TILE_ROWS, (tb // sub) * sub))
    else:
        tb = max(sub, (int(block_rows) // sub) * sub)

    if tb >= B:
        tb = B  # a single full-extent block is always a legal block shape
        # v7x has 2 TensorCores: split a one-tile batch into >= 2 parallel
        # tiles so both cores get streaming work.
        if gen >= 7 and B >= 2 * sub:
            half = (-(-B // 2) + sub - 1) // sub * sub  # ceil(B/2) rounded to sub
            if half < B:
                tb = half

    num_tiles = pl.cdiv(B, tb)
    needs_mask = (B % tb) != 0

    blk_bytes = tb * D * itemsize
    # 2 inputs x 2 pipeline buffers per block + labels/output/slack; never
    # silently under-buffer large blocks, never exceed the per-gen ceiling.
    vmem_limit = int(min(vmem_cap, max(16 << 20, 4 * blk_bytes + (4 << 20))))

    kernel = functools.partial(_contrastive_kernel, margin=float(margin),
                               batch=B, block_rows=tb, needs_mask=needs_mask)

    # NOTE: with the bytes-based tile policy the default double-buffering is
    # sufficient; pl.Buffered(3) is only useful for the tiny-B*D single-tile
    # case where it cannot help anyway, so it is intentionally not used.
    partials = pl.pallas_call(
        kernel,
        out_shape=jax.ShapeDtypeStruct((num_tiles, 1, 128), jnp.float32),
        grid=(num_tiles,),
        in_specs=[
            pl.BlockSpec((tb, D), lambda i: (i, 0)),
            pl.BlockSpec((tb, D), lambda i: (i, 0)),
            pl.BlockSpec((tb, 1), lambda i: (i, 0)),
        ],
        out_specs=pl.BlockSpec((1, 1, 128), lambda i: (i, 0, 0)),
        compiler_params=pltpu.CompilerParams(
            dimension_semantics=("parallel",),
            vmem_limit_bytes=vmem_limit,
        ),
    )(output1, output2, label2d)

    # Tiny final reduction in plain JAX: one scalar per tile, divide by true B.
    return jnp.sum(partials[:, 0, 0]) / jnp.float32(B)


def _reference_loss(output1, output2, label, margin=1.0):
    o1 = output1.astype(jnp.float32)
    o2 = output2.astype(jnp.float32)
    lab = jnp.asarray(label, jnp.float32)
    diff = o1 - o2 + _PAIRWISE_EPS
    dist = jnp.sqrt(jnp.sum(diff * diff, axis=-1))
    hinge = jnp.clip(margin - dist, 0.0, None)
    return jnp.mean((1.0 - lab) * dist * dist + lab * hinge * hinge)


if __name__ == "__main__":
    key = jax.random.PRNGKey(0)

    # Test 1: small shape matching the module's typical use (f32 features).
    k1, k2, k3 = jax.random.split(key, 3)
    B, D = 8, 32
    o1 = jax.random.normal(k1, (B, D), dtype=jnp.float32)
    o2 = jax.random.normal(k2, (B, D), dtype=jnp.float32)
    lab = jax.random.bernoulli(k3, 0.5, (B,)).astype(jnp.float32)

    loss = jax.block_until_ready(contrastive_loss(o1, o2, lab, margin=1.0))
    ref = _reference_loss(o1, o2, lab, margin=1.0)
    assert jnp.allclose(loss, ref, rtol=1e-5, atol=1e-5), (loss, ref)

    # Test 2: multi-tile path with a partial (masked) last tile.
    k4, k5, k6 = jax.random.split(jax.random.PRNGKey(1), 3)
    B2, D2 = 300, 32
    o1b = jax.random.normal(k4, (B2, D2), dtype=jnp.float32)
    o2b = jax.random.normal(k5, (B2, D2), dtype=jnp.float32)
    labb = jax.random.bernoulli(k6, 0.5, (B2,)).astype(jnp.float32)

    loss2 = jax.block_until_ready(
        contrastive_loss(o1b, o2b, labb, margin=1.0, block_rows=128))
    ref2 = _reference_loss(o1b, o2b, labb, margin=1.0)
    assert jnp.allclose(loss2, ref2, rtol=1e-5, atol=1e-5), (loss2, ref2)

    # Test 3: bf16 features on the wire (half the HBM traffic; in-kernel f32).
    k7, k8, k9 = jax.random.split(jax.random.PRNGKey(2), 3)
    B3, D3 = 64, 256
    o1c = jax.random.normal(k7, (B3, D3), dtype=jnp.float32).astype(jnp.bfloat16)
    o2c = jax.random.normal(k8, (B3, D3), dtype=jnp.float32).astype(jnp.bfloat16)
    labc = jax.random.bernoulli(k9, 0.5, (B3,)).astype(jnp.float32)

    loss3 = jax.block_until_ready(contrastive_loss(o1c, o2c, labc, margin=1.0))
    ref3 = _reference_loss(o1c, o2c, labc, margin=1.0)
    assert jnp.allclose(loss3, ref3, rtol=1e-4, atol=1e-4), (loss3, ref3)

    print("KERNEL_OK")
</pallas_src>

<mosaic_0001>
module attributes {stable_mosaic.version = 11 : i64} {
  func.func @_contrastive_kernel(%arg0: i32, %arg1: memref<8x32xf32, #tpu.memory_space<vmem>>, %arg2: memref<8x32xf32, #tpu.memory_space<vmem>>, %arg3: memref<8x1xf32, #tpu.memory_space<vmem>>, %arg4: memref<1x1x128xf32, #tpu.memory_space<vmem>>) attributes {dimension_semantics = [#tpu.dimension_semantics<parallel>], iteration_bounds = array<i64: 1>, scalar_prefetch = 0 : i64, scratch_operands = 0 : i64, tpu.core_type = #tpu.core_type<tc>, window_params = [{transform_indices = @transform_0, window_bounds = array<i64: 8, 32>}, {transform_indices = @transform_1, window_bounds = array<i64: 8, 32>}, {transform_indices = @transform_2, window_bounds = array<i64: 8, 1>}, {transform_indices = @transform_3, window_bounds = array<i64: 1, 1, 128>}]} {
    %c0 = arith.constant 0 : index
    %c0_0 = arith.constant 0 : index
    %0 = vector.load %arg1[%c0, %c0_0] : memref<8x32xf32, #tpu.memory_space<vmem>>, vector<8x32xf32>
    %c0_1 = arith.constant 0 : index
    %c0_2 = arith.constant 0 : index
    %1 = vector.load %arg2[%c0_1, %c0_2] : memref<8x32xf32, #tpu.memory_space<vmem>>, vector<8x32xf32>
    %c0_3 = arith.constant 0 : index
    %c0_4 = arith.constant 0 : index
    %2 = vector.load %arg3[%c0_3, %c0_4] : memref<8x1xf32, #tpu.memory_space<vmem>>, vector<8x1xf32>
    %3 = arith.subf %0, %1 : vector<8x32xf32>
    %cst = arith.constant 9.99999997E-7 : f32
    %4 = vector.broadcast %cst : f32 to vector<8x32xf32>
    %5 = arith.addf %3, %4 : vector<8x32xf32>
    %6 = arith.mulf %5, %5 : vector<8x32xf32>
    %cst_5 = arith.constant dense<0.000000e+00> : vector<8xf32>
    %7 = vector.multi_reduction <add>, %6, %cst_5 [1] : vector<8x32xf32> to vector<8xf32>
    %8 = vector.shape_cast %7 : vector<8xf32> to vector<8x1xf32>
    %9 = math.sqrt %8 : vector<8x1xf32>
    %cst_6 = arith.constant 1.000000e+00 : f32
    %10 = vector.broadcast %cst_6 : f32 to vector<8x1xf32>
    %11 = arith.subf %10, %9 : vector<8x1xf32>
    %cst_7 = arith.constant 0.000000e+00 : f32
    %12 = vector.broadcast %cst_7 : f32 to vector<8x1xf32>
    %13 = arith.maximumf %11, %12 : vector<8x1xf32>
    %cst_8 = arith.constant 1.000000e+00 : f32
    %14 = vector.broadcast %cst_8 : f32 to vector<8x1xf32>
    %15 = arith.subf %14, %2 : vector<8x1xf32>
    %16 = arith.mulf %15, %8 : vector<8x1xf32>
    %17 = arith.mulf %13, %13 : vector<8x1xf32>
    %18 = arith.mulf %2, %17 : vector<8x1xf32>
    %19 = arith.addf %16, %18 : vector<8x1xf32>
    %20 = vector.shape_cast %19 : vector<8x1xf32> to vector<1x8x1xf32>
    %cst_9 = arith.constant dense<0.000000e+00> : vector<1xf32>
    %21 = vector.multi_reduction <add>, %20, %cst_9 [1, 2] : vector<1x8x1xf32> to vector<1xf32>
    %22 = vector.shape_cast %21 : vector<1xf32> to vector<1x1x1xf32>
    %23 = vector.extract %22[0, 0, 0] : f32 from vector<1x1x1xf32>
    %24 = vector.broadcast %23 : f32 to vector<1x1x128xf32>
    %c0_10 = arith.constant 0 : index
    %c0_11 = arith.constant 0 : index
    %c0_12 = arith.constant 0 : index
    %25 = vector.load %arg4[%c0_10, %c0_11, %c0_12] : memref<1x1x128xf32, #tpu.memory_space<vmem>>, vector<1x1x128xf32>
    tpu.vector_store %arg4[%c0_10, %c0_11, %c0_12], %24 {strides = array<i32>} : memref<1x1x128xf32, #tpu.memory_space<vmem>>, vector<1x1x128xf32>,
    return
  }
  func.func @transform_0(%arg0: i32) -> (i32, i32) {
    %c0_i32 = arith.constant 0 : i32
    %c0_i32_0 = arith.constant 0 : i32
    return %arg0, %c0_i32 : i32, i32
  }
  func.func @transform_1(%arg0: i32) -> (i32, i32) {
    %c0_i32 = arith.constant 0 : i32
    %c0_i32_0 = arith.constant 0 : i32
    return %arg0, %c0_i32 : i32, i32
  }
  func.func @transform_2(%arg0: i32) -> (i32, i32) {
    %c0_i32 = arith.constant 0 : i32
    %c0_i32_0 = arith.constant 0 : i32
    return %arg0, %c0_i32 : i32, i32
  }
  func.func @transform_3(%arg0: i32) -> (i32, i32, i32) {
    %c0_i32 = arith.constant 0 : i32
    %c0_i32_0 = arith.constant 0 : i32
    %c0_i32_1 = arith.constant 0 : i32
    return %arg0, %c0_i32, %c0_i32_0 : i32, i32, i32
  }
}

</mosaic_0001>

<llo_original>
// kernel: tpu_custom_call.1
$region0: #{tpu_custom_call.1}
  #allocation0 [shape = 'u32[]', space=smem, size = 0x4, offset = 0x4, fixed_abs, tag = 'smem constant byte address 0x4 - core index']
  #allocation1 [shape = 'u32[144,128]{1,0:T(1,128)}', space=vmem, size = 0x12000, scoped, tag = 'internal scratch']
  %s0 = inlined_call_operand.vmem [shape: f32[8,32], index: 0, kind: input, shape index: {}]
  %s1 = inlined_call_operand.hbm [shape: f32[8,32], index: 1, kind: input, shape index: {}]
  %s2 = inlined_call_operand.vmem [shape: f32[8,1], index: 2, kind: input, shape index: {}]
  %s3 = inlined_call_operand.hbm [shape: f32[1,1,128], index: 3, kind: output, shape index: {}]
  %s4 = sld [smem:[#allocation0]]
  $region26: #{tpu_custom_call.1} parent=0
    _
  %s6 = ssub.s32 1, %s4
  %s7 = scalar_select 0, %s6, %s4
  $region1: #{tpu_custom_call.1} parent=0
    #allocation2 [shape = 'u8[4096]{0}', space=vmem, size = 0x1000, scoped, tag = 'input window, operand 1, single buffered']
    #allocation3 [shape = 's32[1]{0}', space=sflag, size = 0x4, scoped, tag = 'scoped memory for tpu_custom_call.1']
    #allocation4 [shape = 's32[1]{0}', space=sflag, size = 0x4, scoped, tag = 'scoped memory for tpu_custom_call.1']
    #allocation5 [shape = 'u8[512]{0}', space=vmem, size = 0x400, scoped, tag = 'output window, operand 0, single buffered']
    %8 = vsyncpa [#allocation3], 0
    %9 = vsyncpa [#allocation4], 0
    // Predicated region
    $region2: #{tpu_custom_call.1} parent=1 // pred_check
      _
    $region3: #{tpu_custom_call.1} parent=1 // pred_check_branch
      %11 = sbr.rel (0) target = $region5
    $region4: #{tpu_custom_call.1} parent=1 // pred_region
      _
    $region5: #{tpu_custom_call.1} parent=1 // pred_fallthru
      _
    // Predicated region
    $region6: #{tpu_custom_call.1} parent=1 // pred_check
      _
    $region7: #{tpu_custom_call.1} parent=1 // pred_check_branch
      %13 = sbr.rel (0) target = $region9
    $region8: #{tpu_custom_call.1} parent=1 // pred_region
      %s15 = ssub.s32 128, 128
      %16 = vsyncadd [#allocation3], %s15
      %s18 = sshll.u32 [#allocation2], 4
      %s19 = int_to_ptr.vmem [resolvable:$true] %s18
      %21 = dma.hbm_to_vmem [thread:$0]  %s1, 128, %s19, [#allocation3]
    $region9: #{tpu_custom_call.1} parent=1 // pred_fallthru
      _
    // Predicated region
    $region10: #{tpu_custom_call.1} parent=1 // pred_check
      _
    $region11: #{tpu_custom_call.1} parent=1 // pred_check_branch
      %23 = sbr.rel (0) target = $region13
    $region12: #{tpu_custom_call.1} parent=1 // pred_region
      _
    $region13: #{tpu_custom_call.1} parent=1 // pred_fallthru
      _
    // Predicated region
    $region14: #{tpu_custom_call.1} parent=1 // pred_check
      _
    $region15: #{tpu_custom_call.1} parent=1 // pred_check_branch
      %25 = sbr.rel (0) target = $region17
    $region16: #{tpu_custom_call.1} parent=1 // pred_region
      %26 = dma.done [#allocation3], 128
    $region17: #{tpu_custom_call.1} parent=1 // pred_fallthru
      _
    %v27 = vld [vmem:[%s0] sm:$0xff]
    %v28 = vld [vmem:[#allocation2] sm:$0xff]
    %v29 = vld [vmem:[%s2] sm:$0xff]
    %v30 = vsub.f32 %v27, %v28
    %v31 = vadd.f32 %v30, 1e-06
    %v32 = vmul.f32 %v31, %v31
    %vm33 = vcmask 261120
    %v34 = vsel %vm33, %v32, 0.0
    %35 = vadd.xlane.f32.xlu0 %v34
    %v36 = vpop.xlane.xlu0 %35
    %v37 = vrsqrt.pop %v36
    %v38 = vmul.f32 %v36, %v37
    %vm39 = vcmp.eq.f32.partialorder %v36, inf
    %v40 = vsel %vm39, %v36, %v38
    %vm41 = vcmp.eq.f32.partialorder %v36, 0.0
    %v42 = vand.u32 %v36, 2147483648
    %v43 = vsel %vm41, %v42, %v40
    %v44 = vsub.f32 1.0, %v43
    %v45 = vmax.f32 %v44, 0.0
    %v46 = vsub.f32 1.0, %v29
    %v47 = vmul.f32 %v46, %v36
    %v48 = vmul.f32 %v45, %v45
    %v49 = vmul.f32 %v29, %v48
    %v50 = vadd.f32 %v47, %v49
    %vm51 = vcmask 7168
    %v52 = vsel %vm51, %v50, 0.0
    %53 = vadd.xlane.f32.xlu0 %v52
    %v54 = vpop.xlane.xlu0 %53
    %v55 = vrot.slane %v54, 4
    %v56 = vadd.f32 %v54, %v55
    %v57 = vrot.slane %v56, 2
    %v58 = vadd.f32 %v56, %v57
    %v59 = vrot.slane %v58, 1
    %v60 = vadd.f32 %v58, %v59
    %s61 = vtos %v60
    %v62 = vstv %s61
    %63 = vst [vmem:[#allocation5] sm:$0x1] %v62
    // Predicated region
    $region18: #{tpu_custom_call.1} parent=1 // pred_check
      _
    $region19: #{tpu_custom_call.1} parent=1 // pred_check_branch
      %65 = sbr.rel (0) target = $region21
    $region20: #{tpu_custom_call.1} parent=1 // pred_region
      %s67 = ssub.s32 16, 16
      %68 = vsyncadd [#allocation4], %s67
      %s70 = sshll.u32 [#allocation5], 4
      %s71 = int_to_ptr.vmem [resolvable:$true] %s70
      %73 = dma.vmem_to_hbm [thread:$0]  %s71, 16, %s3, [#allocation4]
    $region21: #{tpu_custom_call.1} parent=1 // pred_fallthru
      _
    // Predicated region
    $region22: #{tpu_custom_call.1} parent=1 // pred_check
      _
    $region23: #{tpu_custom_call.1} parent=1 // pred_check_branch
      %75 = sbr.rel (0) target = $region25
    $region24: #{tpu_custom_call.1} parent=1 // pred_region
      %76 = dma.done [#allocation4], 16
    $region25: #{tpu_custom_call.1} parent=1 // pred_fallthru
      _
    %77 = vsyncpa [#allocation3], 1
    %78 = vsyncpa [#allocation4], 1

</llo_original>
